<compile_context>
chip_gen: v7x
topology: tpu7x:2x2x1
jax: 0.10.0
libtpu: 0.0.40
codegen_flags: <defaults>
</compile_context>

<pallas_src>
import functools

import jax
import jax.numpy as jnp
from jax.experimental import pallas as pl
from jax.experimental.pallas import tpu as pltpu


def _round_up(n, m):
    return ((n + m - 1) // m) * m


def probex_kernel(x_ref, w_ref, czt_ref, out_ref, *, d, p):
    """Fused ProbeX forward for one batch tile.

    x_ref:   [tb, d]         bf16  flattened weight matrices (d = dH*dW)
    w_ref:   [d + p + 16, p] bf16  packed params:
                                     rows [0, d)     : Kronecker weight K
                                     rows [d, d+p)   : enc_w (rep padded to p)
                                     row  d+p        : enc_b (rep padded to p)
    czt_ref: [p, c_pad]      bf16  normalized clip_z^T (first rep rows, rest 0)
    out_ref: [tb, c_pad]     f32   logits (extra class columns are 0)
    """
    x = x_ref[...]                                          # [tb, d] bf16

    # relu(x @ K): fuses probes + shared_probe_proj (+ the (1,2) transpose).
    pp = jnp.dot(x, w_ref[0:d, :],
                 preferred_element_type=jnp.float32)        # [tb, p] f32
    pp = jnp.maximum(pp, 0.0).astype(jnp.bfloat16)

    # per_probe_encoders: single [tb, p] @ [p, p] matmul (cols >= rep are 0).
    rep = jnp.dot(pp, w_ref[d:d + p, :],
                  preferred_element_type=jnp.float32)       # [tb, p] f32
    rep = rep + w_ref[d + p:d + p + 1, :].astype(jnp.float32)

    # L2 normalize (padded columns are exactly zero -> sum is unaffected).
    rep = rep * jax.lax.rsqrt(
        jnp.sum(rep * rep, axis=-1, keepdims=True) + 1e-12)

    # logits = rep_norm @ clip_z_norm^T  (lane-dense: c_pad % 128 == 0)
    out_ref[...] = jnp.dot(rep.astype(jnp.bfloat16), czt_ref[...],
                           preferred_element_type=jnp.float32)


def prepare_packed(params):
    """Parameter-only precompute (conceptually cached alongside the params)."""
    probes_w = params['probes_w']        # [dW, nP]   == probes.weight
    proj_w = params['proj_w']            # [dH, proj] == shared_probe_proj.weight.T
    enc_w = params['enc_w']              # [nP, proj, rep]
    enc_b = params['enc_b']              # [1, rep]

    d_w, n_probes = probes_w.shape
    d_h, proj_dim = proj_w.shape
    rep_dim = enc_w.shape[-1]
    d = d_h * d_w
    p = n_probes * proj_dim
    p_pad = _round_up(max(p, 128), 128)   # full-lane intermediates

    # bf16 sublane tile is 16: keep the static row slices of the packed buffer
    # (0:d, d:d+p_pad, d+p_pad:) on packed-sublane boundaries (zero-cost views).
    assert d % 16 == 0 and p_pad % 128 == 0, "packed-layout assumptions"
    assert rep_dim <= p_pad

    # Kronecker fusion of the first two linears:
    #   K[h*dW + w, n*proj + j] = proj_w[h, j] * probes_w[w, n]
    kron = jnp.einsum('hj,wn->hwnj', proj_w, probes_w).reshape(d, p)
    kron = jnp.zeros((d, p_pad), jnp.float32).at[:, :p].set(kron)

    # per_probe_encoders flattened in PyTorch's (n*proj + j) order; both dims
    # zero-padded to p_pad so the kernel never slices the lane axis.
    enc_w_flat = enc_w.reshape(p, rep_dim)
    ew_pad = jnp.zeros((p_pad, p_pad), jnp.float32).at[:p, :rep_dim].set(enc_w_flat)
    eb_pad = jnp.zeros((16, p_pad), jnp.float32).at[0, :rep_dim].set(enc_b[0])

    w_packed = jnp.concatenate([kron, ew_pad, eb_pad], axis=0)
    w_packed = w_packed.astype(jnp.bfloat16)                # [d + p_pad + 16, p_pad]

    return dict(w_packed=w_packed, d=d, p=p_pad, rep=rep_dim,
                reg_w=params['reg_w'], reg_b=params['reg_b'])


def _choose_batch_tile(b, block_b):
    """Tile <= ~block_b rows, minimal batch-padding waste, grid>=2 for big B."""
    n_tiles = max(1, pl.cdiv(b, block_b))
    # Keep >= 2 tiles for large batches so the "parallel" grid axis shards
    # across v7x's two TensorCores (negligible cost on single-TC v5e/v6e).
    if b >= 512:
        n_tiles = max(n_tiles, 2)
    return _round_up(pl.cdiv(b, n_tiles), 16)


def _vmem_bytes(tb, d, p, c_pad, n_rows):
    """Rough double-buffered VMEM footprint of one grid step."""
    x_tile = tb * d * 2            # bf16 input tile
    out_tile = tb * c_pad * 4      # f32 output tile
    w_buf = n_rows * p * 2         # packed params (bf16)
    czt_buf = p * c_pad * 2        # clip matrix (bf16)
    interm = tb * p * 4 * 3 + tb * p * 2   # pp/rep f32 temporaries + bf16 copy
    return 2 * (x_tile + out_tile + w_buf + czt_buf) + interm


def probex_zeroshot(x, clip_embedding, prep, *, block_b=2048):
    """ProbeXZeroshot forward. x: [B, dH, dW], clip_embedding: [C, clip_dim]."""
    b = x.shape[0]
    c = clip_embedding.shape[0]
    d, p, rep_dim = prep['d'], prep['p'], prep['rep']
    w_packed = prep['w_packed']
    n_rows = w_packed.shape[0]

    # Clip branch: depends only on clip_embedding/params -> plain JAX
    # (hoisted out of the kernel; cacheable for a fixed zero-shot class set).
    clip_z = clip_embedding.astype(jnp.float32) @ prep['reg_w'] + prep['reg_b']
    clip_z = clip_z * jax.lax.rsqrt(
        jnp.sum(clip_z * clip_z, axis=-1, keepdims=True) + 1e-12)
    c_pad = _round_up(max(c, 128), 128)                      # lane-dense output
    czt = jnp.zeros((p, c_pad), jnp.float32).at[:rep_dim, :c].set(clip_z.T)
    czt = czt.astype(jnp.bfloat16)                           # [p, c_pad]

    # Wrapper-side layout plumbing: flatten, cast to bf16, pick + pad batch tile.
    x_flat = x.reshape(b, d).astype(jnp.bfloat16)
    tb = _choose_batch_tile(b, block_b)
    budget = 44 << 20   # headroom under v7x's 64 MiB physical VMEM
    while tb > 16 and _vmem_bytes(tb, d, p, c_pad, n_rows) > budget:
        tb = _round_up(tb // 2, 16)
    b_pad = _round_up(b, tb)
    if b_pad != b:
        x_flat = jnp.pad(x_flat, ((0, b_pad - b), (0, 0)))

    vmem_limit = int(min(56 << 20,
                         max(_vmem_bytes(tb, d, p, c_pad, n_rows) + (4 << 20),
                             16 << 20)))

    kernel = functools.partial(probex_kernel, d=d, p=p)
    out = pl.pallas_call(
        kernel,
        out_shape=jax.ShapeDtypeStruct((b_pad, c_pad), jnp.float32),
        grid_spec=pltpu.PrefetchScalarGridSpec(
            num_scalar_prefetch=0,
            grid=(b_pad // tb,),
            in_specs=[
                pl.BlockSpec((tb, d), lambda i: (i, 0)),       # x tile
                pl.BlockSpec((n_rows, p), lambda i: (0, 0)),   # packed params
                pl.BlockSpec((p, c_pad), lambda i: (0, 0)),    # clip_z^T
            ],
            out_specs=pl.BlockSpec((tb, c_pad), lambda i: (i, 0)),
        ),
        compiler_params=pltpu.CompilerParams(
            dimension_semantics=("parallel",),
            vmem_limit_bytes=vmem_limit),
    )(x_flat, w_packed, czt)
    return out[:b, :c]


def probex_reference(x, clip_embedding, params):
    """Plain-JAX reference mirroring the PyTorch forward (unfused, f32)."""
    pr = jnp.einsum('bhw,wn->bhn', x, params['probes_w'])
    pp = jax.nn.relu(jnp.einsum('bhn,hj->bnj', pr, params['proj_w']))
    rep = jnp.einsum('bnj,njt->bt', pp, params['enc_w']) + params['enc_b']
    clip_z = clip_embedding @ params['reg_w'] + params['reg_b']
    clip_z = clip_z / jnp.linalg.norm(clip_z, axis=-1, keepdims=True)
    rep = rep / jnp.linalg.norm(rep, axis=-1, keepdims=True)
    return rep @ clip_z.T


def init_params(key, d_h, d_w, n_probes, proj_dim, rep_dim, clip_dim):
    """Deterministic synthetic parameters (effective, pre-transposed layouts)."""
    k1, k2, k3, k4, k5, k6 = jax.random.split(key, 6)
    scale = 0.05
    # nn.Linear(n_probes, d_w).weight has shape [d_w, n_probes]; used directly.
    probes_w = scale * jax.random.normal(k1, (d_w, n_probes), jnp.float32)
    # nn.Linear(d_h, proj_dim).weight.T -> [d_h, proj_dim]
    proj_w = scale * jax.random.normal(k2, (d_h, proj_dim), jnp.float32)
    # nn.Linear(proj*n_probes, rep_dim).weight.T reshaped to [nP, proj, rep]
    enc_w = scale * jax.random.normal(
        k3, (n_probes, proj_dim, rep_dim), jnp.float32)
    enc_b = scale * jax.random.normal(k4, (1, rep_dim), jnp.float32)
    # nn.Linear(clip_dim, rep_dim).weight.T -> [clip_dim, rep_dim]
    reg_w = scale * jax.random.normal(k5, (clip_dim, rep_dim), jnp.float32)
    reg_b = scale * jax.random.normal(k6, (1, rep_dim), jnp.float32)
    return dict(probes_w=probes_w, proj_w=proj_w, enc_w=enc_w, enc_b=enc_b,
                reg_w=reg_w, reg_b=reg_b)


if __name__ == "__main__":
    # Small shapes consistent with the module.
    B, d_h, d_w = 2, 16, 16          # input_shape = [d_H, d_W]
    n_probes, proj_dim, rep_dim = 8, 8, 32
    clip_dim, n_classes = 128, 4

    key = jax.random.PRNGKey(0)
    kx, kc, kp = jax.random.split(key, 3)
    x = jax.random.normal(kx, (B, d_h, d_w), jnp.float32)
    clip_embedding = jax.random.normal(kc, (n_classes, clip_dim), jnp.float32)
    params = init_params(kp, d_h, d_w, n_probes, proj_dim, rep_dim, clip_dim)

    prep = prepare_packed(params)    # parameter-only precompute (cacheable)

    logits = probex_zeroshot(x, clip_embedding, prep)
    logits = jax.block_until_ready(logits)

    ref = jax.block_until_ready(probex_reference(x, clip_embedding, params))
    assert logits.shape == (B, n_classes), logits.shape
    assert jnp.allclose(logits, ref, rtol=2e-2, atol=2e-2), (logits, ref)

    print("KERNEL_OK")
</pallas_src>

<mosaic_0001>
module attributes {stable_mosaic.version = 11 : i64} {
  func.func @probex_kernel(%arg0: i32, %arg1: memref<16x256xbf16, #tpu.memory_space<vmem>>, %arg2: memref<400x128xbf16, #tpu.memory_space<vmem>>, %arg3: memref<128x128xbf16, #tpu.memory_space<vmem>>, %arg4: memref<16x128xf32, #tpu.memory_space<vmem>>) attributes {dimension_semantics = [#tpu.dimension_semantics<parallel>], iteration_bounds = array<i64: 1>, scalar_prefetch = 0 : i64, scratch_operands = 0 : i64, tpu.core_type = #tpu.core_type<tc>, window_params = [{transform_indices = @transform_0, window_bounds = array<i64: 16, 256>}, {pipeline_mode = #tpu.pipeline_mode<synchronous>, transform_indices = @transform_1, window_bounds = array<i64: 400, 128>}, {pipeline_mode = #tpu.pipeline_mode<synchronous>, transform_indices = @transform_2, window_bounds = array<i64: 128, 128>}, {transform_indices = @transform_3, window_bounds = array<i64: 16, 128>}]} {
    %c0 = arith.constant 0 : index
    %c0_0 = arith.constant 0 : index
    %0 = vector.load %arg1[%c0, %c0_0] : memref<16x256xbf16, #tpu.memory_space<vmem>>, vector<16x256xbf16>
    %c0_1 = arith.constant 0 : index
    %c0_2 = arith.constant 0 : index
    %1 = vector.load %arg2[%c0_1, %c0_2] : memref<400x128xbf16, #tpu.memory_space<vmem>>, vector<256x128xbf16>
    %cst = arith.constant dense<0.000000e+00> : vector<16x128xf32>
    %2 = tpu.matmul %0, %1, %cst {dimension_numbers = #tpu.dot_dimension_numbers<[1], [0], [0], [1], [0, 0, 1, 1], [], []>} : vector<16x256xbf16>, vector<256x128xbf16>, vector<16x128xf32> -> vector<16x128xf32>
    %cst_3 = arith.constant 0.000000e+00 : f32
    %3 = vector.broadcast %cst_3 : f32 to vector<16x128xf32>
    %4 = arith.maximumf %2, %3 : vector<16x128xf32>
    %5 = arith.truncf %4 : vector<16x128xf32> to vector<16x128xbf16>
    %c256 = arith.constant 256 : index
    %c0_4 = arith.constant 0 : index
    %6 = vector.load %arg2[%c256, %c0_4] : memref<400x128xbf16, #tpu.memory_space<vmem>>, vector<128x128xbf16>
    %cst_5 = arith.constant dense<0.000000e+00> : vector<16x128xf32>
    %7 = tpu.matmul %5, %6, %cst_5 {dimension_numbers = #tpu.dot_dimension_numbers<[1], [0], [0], [1], [0, 0, 1, 1], [], []>} : vector<16x128xbf16>, vector<128x128xbf16>, vector<16x128xf32> -> vector<16x128xf32>
    %c384 = arith.constant 384 : index
    %c0_6 = arith.constant 0 : index
    %8 = vector.load %arg2[%c384, %c0_6] : memref<400x128xbf16, #tpu.memory_space<vmem>>, vector<1x128xbf16>
    %9 = arith.extf %8 : vector<1x128xbf16> to vector<1x128xf32>
    %10 = vector.broadcast %9 : vector<1x128xf32> to vector<16x128xf32>
    %11 = arith.addf %7, %10 : vector<16x128xf32>
    %12 = arith.mulf %11, %11 : vector<16x128xf32>
    %cst_7 = arith.constant dense<0.000000e+00> : vector<16xf32>
    %13 = vector.multi_reduction <add>, %12, %cst_7 [1] : vector<16x128xf32> to vector<16xf32>
    %14 = vector.shape_cast %13 : vector<16xf32> to vector<16x1xf32>
    %cst_8 = arith.constant 9.99999996E-13 : f32
    %15 = vector.broadcast %cst_8 : f32 to vector<16x1xf32>
    %16 = arith.addf %14, %15 : vector<16x1xf32>
    %17 = math.rsqrt %16 : vector<16x1xf32>
    %18 = vector.broadcast %17 : vector<16x1xf32> to vector<16x128xf32>
    %19 = arith.mulf %11, %18 : vector<16x128xf32>
    %20 = arith.truncf %19 : vector<16x128xf32> to vector<16x128xbf16>
    %c0_9 = arith.constant 0 : index
    %c0_10 = arith.constant 0 : index
    %21 = vector.load %arg3[%c0_9, %c0_10] : memref<128x128xbf16, #tpu.memory_space<vmem>>, vector<128x128xbf16>
    %cst_11 = arith.constant dense<0.000000e+00> : vector<16x128xf32>
    %22 = tpu.matmul %20, %21, %cst_11 {dimension_numbers = #tpu.dot_dimension_numbers<[1], [0], [0], [1], [0, 0, 1, 1], [], []>} : vector<16x128xbf16>, vector<128x128xbf16>, vector<16x128xf32> -> vector<16x128xf32>
    %c0_12 = arith.constant 0 : index
    %c0_13 = arith.constant 0 : index
    %23 = vector.load %arg4[%c0_12, %c0_13] : memref<16x128xf32, #tpu.memory_space<vmem>>, vector<16x128xf32>
    tpu.vector_store %arg4[%c0_12, %c0_13], %22 {strides = array<i32>} : memref<16x128xf32, #tpu.memory_space<vmem>>, vector<16x128xf32>,
    return
  }
  func.func @transform_0(%arg0: i32) -> (i32, i32) {
    %c0_i32 = arith.constant 0 : i32
    %c0_i32_0 = arith.constant 0 : i32
    return %arg0, %c0_i32 : i32, i32
  }
  func.func @transform_1(%arg0: i32) -> (i32, i32) {
    %c0_i32 = arith.constant 0 : i32
    %c0_i32_0 = arith.constant 0 : i32
    %c0_i32_1 = arith.constant 0 : i32
    return %c0_i32, %c0_i32_0 : i32, i32
  }
  func.func @transform_2(%arg0: i32) -> (i32, i32) {
    %c0_i32 = arith.constant 0 : i32
    %c0_i32_0 = arith.constant 0 : i32
    %c0_i32_1 = arith.constant 0 : i32
    return %c0_i32, %c0_i32_0 : i32, i32
  }
  func.func @transform_3(%arg0: i32) -> (i32, i32) {
    %c0_i32 = arith.constant 0 : i32
    %c0_i32_0 = arith.constant 0 : i32
    return %arg0, %c0_i32 : i32, i32
  }
}

</mosaic_0001>

<llo_original>
// kernel: tpu_custom_call.1
$region0: #{tpu_custom_call.1}
  #allocation0 [shape = 'u32[]', space=smem, size = 0x4, offset = 0x4, fixed_abs, tag = 'smem constant byte address 0x4 - core index']
  #allocation1 [shape = 'u32[144,128]{1,0:T(1,128)}', space=vmem, size = 0x12000, scoped, tag = 'internal scratch']
  %s0 = inlined_call_operand.hbm [shape: bf16[16,256], index: 0, kind: input, shape index: {}]
  %s1 = inlined_call_operand.hbm [shape: bf16[400,128], index: 1, kind: input, shape index: {}]
  %s2 = inlined_call_operand.hbm [shape: bf16[128,128], index: 2, kind: input, shape index: {}]
  %s3 = inlined_call_operand.hbm [shape: f32[16,128], index: 3, kind: output, shape index: {}]
  %s4 = sld [smem:[#allocation0]]
  $region34: #{tpu_custom_call.1} parent=0
    _
  %s6 = ssub.s32 1, %s4
  %s7 = scalar_select 0, %s6, %s4
  $region1: #{tpu_custom_call.1} parent=0
    #allocation2 [shape = 'u8[8192]{0}', space=vmem, size = 0x2000, scoped, tag = 'input window, operand 0, single buffered']
    #allocation3 [shape = 's32[1]{0}', space=sflag, size = 0x4, scoped, tag = 'scoped memory for tpu_custom_call.1']
    #allocation4 [shape = 's32[1]{0}', space=sflag, size = 0x4, scoped, tag = 'scoped memory for tpu_custom_call.1']
    #allocation5 [shape = 'u8[102400]{0}', space=vmem, size = 0x19000, scoped, tag = 'input window, operand 1, single buffered']
    #allocation6 [shape = 's32[1]{0}', space=sflag, size = 0x4, scoped, tag = 'scoped memory for tpu_custom_call.1']
    #allocation7 [shape = 'u8[32768]{0}', space=vmem, size = 0x8000, scoped, tag = 'input window, operand 2, single buffered']
    #allocation8 [shape = 'u8[8192]{0}', space=vmem, size = 0x2000, scoped, tag = 'output window, operand 0, single buffered']
    %8 = vsyncpa [#allocation3], 0
    %9 = vsyncpa [#allocation6], 0
    %10 = vsyncpa [#allocation4], 0
    // Predicated region
    $region2: #{tpu_custom_call.1} parent=1 // pred_check
      _
    $region3: #{tpu_custom_call.1} parent=1 // pred_check_branch
      %12 = sbr.rel (0) target = $region5
    $region4: #{tpu_custom_call.1} parent=1 // pred_region
      %s14 = ssub.s32 256, 256
      %15 = vsyncadd [#allocation3], %s14
      %s16 = sshll.u32 [#allocation2], 4
      %s17 = int_to_ptr.vmem [resolvable:$true] %s16
      %22 = dma.hbm_to_vmem [thread:$0]  %s0, 256, %s17, [#allocation3], 128, 128, 8
    $region5: #{tpu_custom_call.1} parent=1 // pred_fallthru
      _
    // Predicated region
    $region6: #{tpu_custom_call.1} parent=1 // pred_check
      _
    $region7: #{tpu_custom_call.1} parent=1 // pred_check_branch
      %24 = sbr.rel (0) target = $region9
    $region8: #{tpu_custom_call.1} parent=1 // pred_region
      %s26 = ssub.s32 3200, 3200
      %27 = vsyncadd [#allocation6], %s26
      %s28 = sshll.u32 [#allocation5], 4
      %s29 = int_to_ptr.vmem [resolvable:$true] %s28
      %34 = dma.hbm_to_vmem [thread:$0]  %s1, 3200, %s29, [#allocation6], 64, 64, 4
    $region9: #{tpu_custom_call.1} parent=1 // pred_fallthru
      _
    // Predicated region
    $region10: #{tpu_custom_call.1} parent=1 // pred_check
      _
    $region11: #{tpu_custom_call.1} parent=1 // pred_check_branch
      %36 = sbr.rel (0) target = $region13
    $region12: #{tpu_custom_call.1} parent=1 // pred_region
      %s38 = ssub.s32 1024, 1024
      %39 = vsyncadd [#allocation6], %s38
      %s40 = sshll.u32 [#allocation7], 4
      %s41 = int_to_ptr.vmem [resolvable:$true] %s40
      %46 = dma.hbm_to_vmem [thread:$0]  %s2, 1024, %s41, [#allocation6], 64, 64, 4
    $region13: #{tpu_custom_call.1} parent=1 // pred_fallthru
      _
    // Predicated region
    $region14: #{tpu_custom_call.1} parent=1 // pred_check
      _
    $region15: #{tpu_custom_call.1} parent=1 // pred_check_branch
      %48 = sbr.rel (0) target = $region17
    $region16: #{tpu_custom_call.1} parent=1 // pred_region
      %49 = dma.done [#allocation3], 256
    $region17: #{tpu_custom_call.1} parent=1 // pred_fallthru
      _
    // Predicated region
    $region18: #{tpu_custom_call.1} parent=1 // pred_check
      _
    $region19: #{tpu_custom_call.1} parent=1 // pred_check_branch
      %51 = sbr.rel (0) target = $region21
    $region20: #{tpu_custom_call.1} parent=1 // pred_region
      %52 = dma.done [#allocation6], 3200
    $region21: #{tpu_custom_call.1} parent=1 // pred_fallthru
      _
    // Predicated region
    $region22: #{tpu_custom_call.1} parent=1 // pred_check
      _
    $region23: #{tpu_custom_call.1} parent=1 // pred_check_branch
      %54 = sbr.rel (0) target = $region25
    $region24: #{tpu_custom_call.1} parent=1 // pred_region
      %55 = dma.done [#allocation6], 1024
    $region25: #{tpu_custom_call.1} parent=1 // pred_fallthru
      _
    %v57 = vld [vmem:[#allocation2] sm:$0xff]
    %v58 = vld [vmem:[#allocation2 + $0x8] sm:$0xff]
    %v59 = vld [vmem:[#allocation5] sm:$0xf]
    %v60 = vld [vmem:[#allocation5 + $0x4] sm:$0xf]
    %v61 = vld [vmem:[#allocation5 + $0x8] sm:$0xf]
    %v62 = vld [vmem:[#allocation5 + $0xc] sm:$0xf]
    %v63 = vld [vmem:[#allocation5 + $0x10] sm:$0xf]
    %v64 = vld [vmem:[#allocation5 + $0x14] sm:$0xf]
    %v65 = vld [vmem:[#allocation5 + $0x18] sm:$0xf]
    %v66 = vld [vmem:[#allocation5 + $0x1c] sm:$0xf]
    %v67 = vld [vmem:[#allocation5 + $0x20] sm:$0xf]
    %v68 = vld [vmem:[#allocation5 + $0x24] sm:$0xf]
    %v69 = vld [vmem:[#allocation5 + $0x28] sm:$0xf]
    %v70 = vld [vmem:[#allocation5 + $0x2c] sm:$0xf]
    %v71 = vld [vmem:[#allocation5 + $0x30] sm:$0xf]
    %v72 = vld [vmem:[#allocation5 + $0x34] sm:$0xf]
    %v73 = vld [vmem:[#allocation5 + $0x38] sm:$0xf]
    %v74 = vld [vmem:[#allocation5 + $0x3c] sm:$0xf]
    %v75 = vld [vmem:[#allocation5 + $0x40] sm:$0xf]
    %v76 = vld [vmem:[#allocation5 + $0x44] sm:$0xf]
    %v77 = vld [vmem:[#allocation5 + $0x48] sm:$0xf]
    %v78 = vld [vmem:[#allocation5 + $0x4c] sm:$0xf]
    %v79 = vld [vmem:[#allocation5 + $0x50] sm:$0xf]
    %v80 = vld [vmem:[#allocation5 + $0x54] sm:$0xf]
    %v81 = vld [vmem:[#allocation5 + $0x58] sm:$0xf]
    %v82 = vld [vmem:[#allocation5 + $0x5c] sm:$0xf]
    %v83 = vld [vmem:[#allocation5 + $0x60] sm:$0xf]
    %v84 = vld [vmem:[#allocation5 + $0x64] sm:$0xf]
    %v85 = vld [vmem:[#allocation5 + $0x68] sm:$0xf]
    %v86 = vld [vmem:[#allocation5 + $0x6c] sm:$0xf]
    %v87 = vld [vmem:[#allocation5 + $0x70] sm:$0xf]
    %v88 = vld [vmem:[#allocation5 + $0x74] sm:$0xf]
    %v89 = vld [vmem:[#allocation5 + $0x78] sm:$0xf]
    %v90 = vld [vmem:[#allocation5 + $0x7c] sm:$0xf]
    %v93 = vunpack.c.l.b16 %v57
    %v94 = vunpack.c.h.b16 %v57
    %v95 = vunpack.c.l.b16 %v58
    %v96 = vunpack.c.h.b16 %v58
    %v97 = vpack.c.b16 %v95, %v93
    %v98 = vpack.c.b16 %v96, %v94
    %v133 = vunpack.c.l.b16 %v59
    %v134 = vunpack.c.l.b16 %v60
    %v135 = vunpack.c.l.b16 %v61
    %v136 = vunpack.c.l.b16 %v62
    %v137 = vunpack.c.l.b16 %v63
    %v138 = vunpack.c.l.b16 %v64
    %v139 = vunpack.c.l.b16 %v65
    %v140 = vunpack.c.l.b16 %v66
    %v141 = vunpack.c.l.b16 %v67
    %v142 = vunpack.c.l.b16 %v68
    %v143 = vunpack.c.l.b16 %v69
    %v144 = vunpack.c.l.b16 %v70
    %v145 = vunpack.c.l.b16 %v71
    %v146 = vunpack.c.l.b16 %v72
    %v147 = vunpack.c.l.b16 %v73
    %v148 = vunpack.c.l.b16 %v74
    %v149 = vunpack.c.l.b16 %v75
    %v150 = vunpack.c.l.b16 %v76
    %v151 = vunpack.c.l.b16 %v77
    %v152 = vunpack.c.l.b16 %v78
    %v153 = vunpack.c.l.b16 %v79
    %v154 = vunpack.c.l.b16 %v80
    %v155 = vunpack.c.l.b16 %v81
    %v156 = vunpack.c.l.b16 %v82
    %v157 = vunpack.c.l.b16 %v83
    %v158 = vunpack.c.l.b16 %v84
    %v159 = vunpack.c.l.b16 %v85
    %v160 = vunpack.c.l.b16 %v86
    %v161 = vunpack.c.l.b16 %v87
    %v162 = vunpack.c.l.b16 %v88
    %v163 = vunpack.c.l.b16 %v89
    %v164 = vunpack.c.l.b16 %v90
    %v165 = vpack.c.b16 %v134, %v133
    %v166 = vpack.c.b16 %v136, %v135
    %v167 = vpack.c.b16 %v138, %v137
    %v168 = vpack.c.b16 %v140, %v139
    %v169 = vpack.c.b16 %v142, %v141
    %v170 = vpack.c.b16 %v144, %v143
    %v171 = vpack.c.b16 %v146, %v145
    %v172 = vpack.c.b16 %v148, %v147
    %v173 = vpack.c.b16 %v150, %v149
    %v174 = vpack.c.b16 %v152, %v151
    %v175 = vpack.c.b16 %v154, %v153
    %v176 = vpack.c.b16 %v156, %v155
    %v177 = vpack.c.b16 %v158, %v157
    %v178 = vpack.c.b16 %v160, %v159
    %v179 = vpack.c.b16 %v162, %v161
    %v180 = vpack.c.b16 %v164, %v163
    %197 = vmatprep.subr.bf16.mxu0 0
    %198 = vmatpush1.bf16.msra.mxu0 %v165
    %199 = vmatprep.subr.bf16.mxu0 0
    %200 = vmatpush1.bf16.msra.mxu0 %v166
    %201 = vmatprep.subr.bf16.mxu0 0
    %202 = vmatpush1.bf16.msra.mxu0 %v167
    %203 = vmatprep.subr.bf16.mxu0 0
    %204 = vmatpush1.bf16.msra.mxu0 %v168
    %205 = vmatprep.subr.bf16.mxu0 0
    %206 = vmatpush1.bf16.msra.mxu0 %v169
    %207 = vmatprep.subr.bf16.mxu0 0
    %208 = vmatpush1.bf16.msra.mxu0 %v170
    %209 = vmatprep.subr.bf16.mxu0 0
    %210 = vmatpush1.bf16.msra.mxu0 %v171
    %211 = vmatprep.subr.bf16.mxu0 0
    %212 = vmatpush1.bf16.msra.mxu0 %v172
    %213 = vmatprep.subr.bf16.mxu0 0
    %214 = vmatpush1.bf16.msra.mxu0 %v173
    %215 = vmatprep.subr.bf16.mxu0 0
    %216 = vmatpush1.bf16.msra.mxu0 %v174
    %217 = vmatprep.subr.bf16.mxu0 0
    %218 = vmatpush1.bf16.msra.mxu0 %v175
    %219 = vmatprep.subr.bf16.mxu0 0
    %220 = vmatpush1.bf16.msra.mxu0 %v176
    %221 = vmatprep.subr.bf16.mxu0 0
    %222 = vmatpush1.bf16.msra.mxu0 %v177
    %223 = vmatprep.subr.bf16.mxu0 0
    %224 = vmatpush1.bf16.msra.mxu0 %v178
    %225 = vmatprep.subr.bf16.mxu0 0
    %226 = vmatpush1.bf16.msra.mxu0 %v179
    %227 = vmatprep.subr.bf16.mxu0 0
    %228 = vmatpush1.bf16.msra.mxu0 %v180
    %229 = vmatprep.mubr.bf16.mxu0 %v98
    %230 = vmatmul.mubr.bf16.gmra.mrb[0].mxu0 %v97
    %v231 = vpop.f32.mrb[0].mxu0
    %v232 = vadd.f32 0.0, %v231
    %v233 = vpop.f32.mrb[0].mxu0
    %v234 = vpop.f32.mrb[0].mxu0
    %v235 = vadd.f32 0.0, %v234
    %v236 = vpop.f32.mrb[0].mxu0
    %237 = vdwg.mxu0
    %v238 = vmax.f32 %v232, 0.0
    %v239 = vmax.f32 %v235, 0.0
    %v240 = vpack.c.bf16 %v239, %v238
    %v241 = vld [vmem:[#allocation5 + $0x80] sm:$0xf]
    %v242 = vld [vmem:[#allocation5 + $0x84] sm:$0xf]
    %v243 = vld [vmem:[#allocation5 + $0x88] sm:$0xf]
    %v244 = vld [vmem:[#allocation5 + $0x8c] sm:$0xf]
    %v245 = vld [vmem:[#allocation5 + $0x90] sm:$0xf]
    %v246 = vld [vmem:[#allocation5 + $0x94] sm:$0xf]
    %v247 = vld [vmem:[#allocation5 + $0x98] sm:$0xf]
    %v248 = vld [vmem:[#allocation5 + $0x9c] sm:$0xf]
    %v249 = vld [vmem:[#allocation5 + $0xa0] sm:$0xf]
    %v250 = vld [vmem:[#allocation5 + $0xa4] sm:$0xf]
    %v251 = vld [vmem:[#allocation5 + $0xa8] sm:$0xf]
    %v252 = vld [vmem:[#allocation5 + $0xac] sm:$0xf]
    %v253 = vld [vmem:[#allocation5 + $0xb0] sm:$0xf]
    %v254 = vld [vmem:[#allocation5 + $0xb4] sm:$0xf]
    %v255 = vld [vmem:[#allocation5 + $0xb8] sm:$0xf]
    %v256 = vld [vmem:[#allocation5 + $0xbc] sm:$0xf]
    %v257 = vld [vmem:[#allocation5 + $0xc0] sm:$0x1]
    %v258 = vunpack.c.l.bf16 %v257
    %v259 = vlaneseq
    %v260 = vshrl.u32 %v259, 7
    %v261 = vsub.s32 0, %v260
    %v262 = vrot.slane %v258, %v261
    %v279 = vunpack.c.l.b16 %v241
    %v280 = vunpack.c.l.b16 %v242
    %v281 = vunpack.c.l.b16 %v243
    %v282 = vunpack.c.l.b16 %v244
    %v283 = vunpack.c.l.b16 %v245
    %v284 = vunpack.c.l.b16 %v246
    %v285 = vunpack.c.l.b16 %v247
    %v286 = vunpack.c.l.b16 %v248
    %v287 = vunpack.c.l.b16 %v249
    %v288 = vunpack.c.l.b16 %v250
    %v289 = vunpack.c.l.b16 %v251
    %v290 = vunpack.c.l.b16 %v252
    %v291 = vunpack.c.l.b16 %v253
    %v292 = vunpack.c.l.b16 %v254
    %v293 = vunpack.c.l.b16 %v255
    %v294 = vunpack.c.l.b16 %v256
    %v295 = vpack.c.b16 %v280, %v279
    %v296 = vpack.c.b16 %v282, %v281
    %v297 = vpack.c.b16 %v284, %v283
    %v298 = vpack.c.b16 %v286, %v285
    %v299 = vpack.c.b16 %v288, %v287
    %v300 = vpack.c.b16 %v290, %v289
    %v301 = vpack.c.b16 %v292, %v291
    %v302 = vpack.c.b16 %v294, %v293
    %311 = vmatprep.subr.bf16.mxu0 0
    %312 = vmatpush1.bf16.msra.mxu0 %v295
    %313 = vmatprep.subr.bf16.mxu0 0
    %314 = vmatpush1.bf16.msra.mxu0 %v296
    %315 = vmatprep.subr.bf16.mxu0 0
    %316 = vmatpush1.bf16.msra.mxu0 %v297
    %317 = vmatprep.subr.bf16.mxu0 0
    %318 = vmatpush1.bf16.msra.mxu0 %v298
    %319 = vmatprep.subr.bf16.mxu0 0
    %320 = vmatpush1.bf16.msra.mxu0 %v299
    %321 = vmatprep.subr.bf16.mxu0 0
    %322 = vmatpush1.bf16.msra.mxu0 %v300
    %323 = vmatprep.subr.bf16.mxu0 0
    %324 = vmatpush1.bf16.msra.mxu0 %v301
    %325 = vmatprep.subr.bf16.mxu0 0
    %326 = vmatpush1.bf16.msra.mxu0 %v302
    %327 = vmatprep.subr.bf16.mxu0 0
    %328 = vmatpush1.bf16.msra.mxu0 0
    %329 = vmatprep.subr.bf16.mxu0 0
    %330 = vmatpush1.bf16.msra.mxu0 0
    %331 = vmatprep.subr.bf16.mxu0 0
    %332 = vmatpush1.bf16.msra.mxu0 0
    %333 = vmatprep.subr.bf16.mxu0 0
    %334 = vmatpush1.bf16.msra.mxu0 0
    %335 = vmatprep.subr.bf16.mxu0 0
    %336 = vmatpush1.bf16.msra.mxu0 0
    %337 = vmatprep.subr.bf16.mxu0 0
    %338 = vmatpush1.bf16.msra.mxu0 0
    %339 = vmatprep.subr.bf16.mxu0 0
    %340 = vmatpush1.bf16.msra.mxu0 0
    %341 = vmatprep.subr.bf16.mxu0 0
    %342 = vmatpush1.bf16.msra.mxu0 0
    %343 = vmatprep.mubr.bf16.mxu0 0
    %344 = vmatmul.mubr.bf16.gmra.mrb[0].mxu0 %v240
    %v345 = vpop.f32.mrb[0].mxu0
    %v346 = vadd.f32 %v262, %v345
    %v347 = vpop.f32.mrb[0].mxu0
    %v348 = vpop.f32.mrb[0].mxu0
    %v349 = vadd.f32 %v262, %v348
    %v350 = vpop.f32.mrb[0].mxu0
    %351 = vdwg.mxu0
    %v352 = vmul.f32 %v346, %v346
    %v353 = vmul.f32 %v349, %v349
    %354 = vadd.xlane.f32.xlu0 %v352
    %v355 = vpop.xlane.xlu0 %354
    %356 = vadd.xlane.f32.xlu0 %v353
    %v357 = vpop.xlane.xlu0 %356
    %v358 = vadd.f32 %v355, 1e-12
    %v359 = vadd.f32 %v357, 1e-12
    %v360 = vrsqrt.pop %v358
    %v361 = vrsqrt.pop %v359
    %v362 = vmul.f32 %v346, %v360
    %v363 = vmul.f32 %v349, %v361
    %v364 = vpack.c.bf16 %v363, %v362
    %v365 = vld [vmem:[#allocation7] sm:$0xf]
    %v366 = vld [vmem:[#allocation7 + $0x4] sm:$0xf]
    %v367 = vld [vmem:[#allocation7 + $0x8] sm:$0xf]
    %v368 = vld [vmem:[#allocation7 + $0xc] sm:$0xf]
    %v369 = vld [vmem:[#allocation7 + $0x10] sm:$0xf]
    %v370 = vld [vmem:[#allocation7 + $0x14] sm:$0xf]
    %v371 = vld [vmem:[#allocation7 + $0x18] sm:$0xf]
    %v372 = vld [vmem:[#allocation7 + $0x1c] sm:$0xf]
    %v373 = vld [vmem:[#allocation7 + $0x20] sm:$0xf]
    %v374 = vld [vmem:[#allocation7 + $0x24] sm:$0xf]
    %v375 = vld [vmem:[#allocation7 + $0x28] sm:$0xf]
    %v376 = vld [vmem:[#allocation7 + $0x2c] sm:$0xf]
    %v377 = vld [vmem:[#allocation7 + $0x30] sm:$0xf]
    %v378 = vld [vmem:[#allocation7 + $0x34] sm:$0xf]
    %v379 = vld [vmem:[#allocation7 + $0x38] sm:$0xf]
    %v380 = vld [vmem:[#allocation7 + $0x3c] sm:$0xf]
    %v397 = vunpack.c.l.b16 %v365
    %v398 = vunpack.c.l.b16 %v366
    %v399 = vunpack.c.l.b16 %v367
    %v400 = vunpack.c.l.b16 %v368
    %v401 = vunpack.c.l.b16 %v369
    %v402 = vunpack.c.l.b16 %v370
    %v403 = vunpack.c.l.b16 %v371
    %v404 = vunpack.c.l.b16 %v372
    %v405 = vunpack.c.l.b16 %v373
    %v406 = vunpack.c.l.b16 %v374
    %v407 = vunpack.c.l.b16 %v375
    %v408 = vunpack.c.l.b16 %v376
    %v409 = vunpack.c.l.b16 %v377
    %v410 = vunpack.c.l.b16 %v378
    %v411 = vunpack.c.l.b16 %v379
    %v412 = vunpack.c.l.b16 %v380
    %v413 = vpack.c.b16 %v398, %v397
    %v414 = vpack.c.b16 %v400, %v399
    %v415 = vpack.c.b16 %v402, %v401
    %v416 = vpack.c.b16 %v404, %v403
    %v417 = vpack.c.b16 %v406, %v405
    %v418 = vpack.c.b16 %v408, %v407
    %v419 = vpack.c.b16 %v410, %v409
    %v420 = vpack.c.b16 %v412, %v411
    %429 = vmatprep.subr.bf16.mxu0 0
    %430 = vmatpush1.bf16.msra.mxu0 %v413
    %431 = vmatprep.subr.bf16.mxu0 0
    %432 = vmatpush1.bf16.msra.mxu0 %v414
    %433 = vmatprep.subr.bf16.mxu0 0
    %434 = vmatpush1.bf16.msra.mxu0 %v415
    %435 = vmatprep.subr.bf16.mxu0 0
    %436 = vmatpush1.bf16.msra.mxu0 %v416
    %437 = vmatprep.subr.bf16.mxu0 0
    %438 = vmatpush1.bf16.msra.mxu0 %v417
    %439 = vmatprep.subr.bf16.mxu0 0
    %440 = vmatpush1.bf16.msra.mxu0 %v418
    %441 = vmatprep.subr.bf16.mxu0 0
    %442 = vmatpush1.bf16.msra.mxu0 %v419
    %443 = vmatprep.subr.bf16.mxu0 0
    %444 = vmatpush1.bf16.msra.mxu0 %v420
    %445 = vmatprep.subr.bf16.mxu0 0
    %446 = vmatpush1.bf16.msra.mxu0 0
    %447 = vmatprep.subr.bf16.mxu0 0
    %448 = vmatpush1.bf16.msra.mxu0 0
    %449 = vmatprep.subr.bf16.mxu0 0
    %450 = vmatpush1.bf16.msra.mxu0 0
    %451 = vmatprep.subr.bf16.mxu0 0
    %452 = vmatpush1.bf16.msra.mxu0 0
    %453 = vmatprep.subr.bf16.mxu0 0
    %454 = vmatpush1.bf16.msra.mxu0 0
    %455 = vmatprep.subr.bf16.mxu0 0
    %456 = vmatpush1.bf16.msra.mxu0 0
    %457 = vmatprep.subr.bf16.mxu0 0
    %458 = vmatpush1.bf16.msra.mxu0 0
    %459 = vmatprep.subr.bf16.mxu0 0
    %460 = vmatpush1.bf16.msra.mxu0 0
    %461 = vmatprep.mubr.bf16.mxu0 0
    %462 = vmatmul.mubr.bf16.gmra.mrb[0].mxu0 %v364
    %v463 = vpop.f32.mrb[0].mxu0
    %v464 = vadd.f32 0.0, %v463
    %v465 = vpop.f32.mrb[0].mxu0
    %v466 = vpop.f32.mrb[0].mxu0
    %v467 = vadd.f32 0.0, %v466
    %v468 = vpop.f32.mrb[0].mxu0
    %469 = vdwg.mxu0
    %470 = vst [vmem:[#allocation8] sm:$0xff] %v464
    %471 = vst [vmem:[#allocation8 + $0x8] sm:$0xff] %v467
    // Predicated region
    $region26: #{tpu_custom_call.1} parent=1 // pred_check
      _
    $region27: #{tpu_custom_call.1} parent=1 // pred_check_branch
      %473 = sbr.rel (0) target = $region29
    $region28: #{tpu_custom_call.1} parent=1 // pred_region
      %s475 = ssub.s32 256, 256
      %476 = vsyncadd [#allocation4], %s475
      %s477 = sshll.u32 [#allocation8], 4
      %s478 = int_to_ptr.vmem [resolvable:$true] %s477
      %483 = dma.vmem_to_hbm [thread:$0]  %s478, 256, %s3, [#allocation4], 128, 128, 8
    $region29: #{tpu_custom_call.1} parent=1 // pred_fallthru
      _
    // Predicated region
    $region30: #{tpu_custom_call.1} parent=1 // pred_check
      _
    $region31: #{tpu_custom_call.1} parent=1 // pred_check_branch
      %485 = sbr.rel (0) target = $region33
    $region32: #{tpu_custom_call.1} parent=1 // pred_region
      %486 = dma.done [#allocation4], 256
    $region33: #{tpu_custom_call.1} parent=1 // pred_fallthru
      _
    %487 = vsyncpa [#allocation3], 1
    %488 = vsyncpa [#allocation6], 1
    %489 = vsyncpa [#allocation4], 1

</llo_original>
